<compile_context>
chip_gen: v5e
topology: v5e:2x2
jax: 0.10.0
libtpu: 0.0.40
codegen_flags: <defaults>
</compile_context>

<pallas_src>
import functools

import jax
import jax.numpy as jnp
from jax.experimental import pallas as pl
from jax.experimental.pallas import tpu as pltpu


def _attention_kernel(img_ref, h_ref, wf_ref, wd_ref, b_ref, wa_ref, out_ref,
                      *, n_regions):
    # One tile of TB batch elements per grid step.
    x = img_ref[...]                               # (TB, NP, F)
    tb, np_, f = x.shape

    # att2 + folded (features + decoder) bias: one (TB, D) @ (D, A) MXU matmul.
    att2 = jnp.dot(h_ref[...], wd_ref[...],
                   preferred_element_type=jnp.float32) + b_ref[...]           # (TB, A)

    # Fused-M att1: one (TB*NP, F) @ (F, A) matmul fills the MXU rows.
    # NP is a multiple of 8, so the reshape is a sublane-clean no-op and Wf is
    # used as a single resident copy (no per-batch broadcast).
    att1 = jnp.dot(x.reshape(tb * np_, f), wf_ref[...],
                   preferred_element_type=jnp.float32)                        # (TB*NP, A)
    att1 = att1.reshape(tb, np_, -1)                                          # (TB, NP, A)

    # relu(att1 + att2.unsqueeze(1)); dropout is identity in eval mode.
    z = jnp.maximum(att1 + att2[:, None, :], 0.0)                             # (TB, NP, A)

    # full_att: degenerate (A, 1) matmul -> VPU broadcast-mul + lane reduce.
    e = jnp.sum(z * wa_ref[...], axis=-1)                                     # (TB, NP)

    # Mask the padded regions: zero-padded features still produce finite,
    # nonzero logits through the bias + relu path, so they MUST be excluded.
    ridx = jax.lax.broadcasted_iota(jnp.int32, e.shape, 1)
    e = jnp.where(ridx < n_regions, e, -1e30)

    # Softmax over the region dim, lane-dense (TB, NP), EUP reciprocal.
    m = jnp.max(e, axis=-1, keepdims=True)                                    # (TB, 1)
    p = jnp.exp(e - m)
    denom = jnp.sum(p, axis=-1, keepdims=True)                                # (TB, 1)
    alpha = p * pl.reciprocal(denom, approx=True)                             # (TB, NP)

    # (image_features * alpha).sum(dim=1): padded regions contribute ~0.
    out = jnp.sum(x.astype(jnp.float32) * alpha[:, :, None], axis=1)          # (TB, F)
    out_ref[...] = out.astype(out_ref.dtype)


def _pick_tb(B, NP, F, D, A, in_itemsize, budget_bytes=32 << 20, tb_max=128):
    """Largest multiple-of-8 batch tile <= tb_max whose working set fits budget."""
    resident = (F * A + D * A + 2 * A) * 4          # resident weights/biases (f32 bound)

    def tile_bytes(tb):
        stream = 2 * tb * (NP * F + D) * in_itemsize + 2 * tb * F * 4  # dbl-buffered I/O
        interm = 2 * tb * NP * A * 4                                   # att1 / z (f32)
        return resident + stream + interm

    tb = min(tb_max, max(8, pl.cdiv(B, 8) * 8))
    tb -= tb % 8
    while tb > 8 and tile_bytes(tb) > budget_bytes:
        tb -= 8
    return tb


def attention_forward(image_features, decoder_hidden, wf, bf, wd, bd, wa, ba,
                      *, tb=None, use_bf16_matmul=False,
                      vmem_limit_bytes=48 << 20):
    """image_features (B,N,F) f32, decoder_hidden (B,D) f32.
    wf (F,A), wd (D,A): weight-normalized, pre-transposed weights.
    wa (1,A): weight-normalized full_att weight row.
    bf (1,A), bd (1,A), ba (1,1): biases."""
    B, N, F = image_features.shape
    _, D = decoder_hidden.shape
    A = wf.shape[1]

    # ---- wrapper-side prep (plain JAX glue) -------------------------------
    # Fold bf into bd (both are added to every pre-relu logit row); ba adds the
    # same scalar to every softmax logit, so it is dropped (shift-invariant).
    b_fused = (bd + bf).astype(jnp.float32)                                   # (1, A)
    del ba

    # Pad the region axis to a multiple of 8 for the sublane-clean fused-M
    # reshape; padded regions are masked inside the kernel.
    NP = pl.cdiv(N, 8) * 8
    if NP != N:
        image_features = jnp.pad(image_features, ((0, 0), (0, NP - N), (0, 0)))

    # Optional bf16 MXU operands (v6e/v7x): halves HBM traffic + VMEM for the
    # dominant image stream; accumulation stays f32 via preferred_element_type
    # and all elementwise math is f32 (v5e-safe).
    mm_dtype = jnp.bfloat16 if use_bf16_matmul else image_features.dtype
    img = image_features.astype(mm_dtype)
    hid = decoder_hidden.astype(mm_dtype)
    wf_in = wf.astype(mm_dtype)
    wd_in = wd.astype(mm_dtype)
    wa_in = wa.astype(jnp.float32)

    if tb is None:
        tb = _pick_tb(B, NP, F, D, A, jnp.dtype(mm_dtype).itemsize)

    Bp = pl.cdiv(B, tb) * tb
    if Bp != B:
        pad = Bp - B
        img = jnp.pad(img, ((0, pad), (0, 0), (0, 0)))
        hid = jnp.pad(hid, ((0, pad), (0, 0)))

    grid_spec = pltpu.PrefetchScalarGridSpec(
        num_scalar_prefetch=0,
        grid=(Bp // tb,),
        in_specs=[
            pl.BlockSpec((tb, NP, F), lambda b: (b, 0, 0)),   # image tile (streamed)
            pl.BlockSpec((tb, D),     lambda b: (b, 0)),      # hidden tile (streamed)
            pl.BlockSpec((F, A),      lambda b: (0, 0)),      # W_features (resident)
            pl.BlockSpec((D, A),      lambda b: (0, 0)),      # W_decoder  (resident)
            pl.BlockSpec((1, A),      lambda b: (0, 0)),      # fused bias (bf + bd)
            pl.BlockSpec((1, A),      lambda b: (0, 0)),      # W_full row (resident)
        ],
        out_specs=pl.BlockSpec((tb, F), lambda b: (b, 0)),
    )

    out = pl.pallas_call(
        functools.partial(_attention_kernel, n_regions=N),
        out_shape=jax.ShapeDtypeStruct((Bp, F), jnp.float32),
        grid_spec=grid_spec,
        compiler_params=pltpu.CompilerParams(
            dimension_semantics=("parallel",),     # batch tiles shard across TCs
            vmem_limit_bytes=vmem_limit_bytes),
    )(img, hid, wf_in, wd_in, b_fused, wa_in)

    return out[:B]


def _weight_norm(v, g):
    """PyTorch weight_norm for nn.Linear: v (out,in), g (out,1).
    Effective W = g * v / ||v||_row  (norm over dim=1)."""
    norm = jnp.sqrt(jnp.sum(v * v, axis=1, keepdims=True))
    return g * v / norm


def _reference(image_features, decoder_hidden, Wf, bf, Wd, bd, Wa, ba):
    # Pure-JAX reference mirroring the PyTorch forward (eval mode, mask=None).
    att1 = image_features @ Wf.T + bf                      # (B,N,A)
    att2 = decoder_hidden @ Wd.T + bd                      # (B,A)
    z = jax.nn.relu(att1 + att2[:, None, :])
    att = (z @ Wa.T + ba)[..., 0]                          # (B,N)
    alpha = jax.nn.softmax(att, axis=1)
    return jnp.sum(image_features * alpha[..., None], axis=1)


if __name__ == "__main__":
    # Small shapes consistent with the module: 36 image regions.
    B, N = 2, 36
    features_dim, decoder_dim, attention_dim = 32, 32, 32

    key = jax.random.PRNGKey(0)
    keys = jax.random.split(key, 10)

    image_features = jax.random.normal(keys[0], (B, N, features_dim), jnp.float32)
    decoder_hidden = jax.random.normal(keys[1], (B, decoder_dim), jnp.float32)

    # weight_norm(Linear) parameters: v (out,in), g (out,1), bias (out,)
    vf = jax.random.normal(keys[2], (attention_dim, features_dim), jnp.float32) * 0.1
    gf = jax.random.normal(keys[3], (attention_dim, 1), jnp.float32) * 0.1 + 1.0
    bf = jax.random.normal(keys[4], (attention_dim,), jnp.float32) * 0.1

    vd = jax.random.normal(keys[5], (attention_dim, decoder_dim), jnp.float32) * 0.1
    gd = jax.random.normal(keys[6], (attention_dim, 1), jnp.float32) * 0.1 + 1.0
    bd = jax.random.normal(keys[7], (attention_dim,), jnp.float32) * 0.1

    va = jax.random.normal(keys[8], (1, attention_dim), jnp.float32) * 0.1
    ga = jnp.ones((1, 1), jnp.float32)
    ba = jax.random.normal(keys[9], (1,), jnp.float32) * 0.1

    # Materialize weight-normalized weights (parameter setup glue in plain JAX).
    Wf = _weight_norm(vf, gf)   # (A, F)
    Wd = _weight_norm(vd, gd)   # (A, D)
    Wa = _weight_norm(va, ga)   # (1, A)

    out = attention_forward(
        image_features, decoder_hidden,
        Wf.T, bf.reshape(1, -1),
        Wd.T, bd.reshape(1, -1),
        Wa, ba.reshape(1, 1),
    )
    out = jax.block_until_ready(out)

    ref = _reference(image_features, decoder_hidden, Wf, bf, Wd, bd, Wa, ba)
    assert out.shape == (B, features_dim)
    # approx=True reciprocal in the softmax -> slightly looser tolerance.
    assert jnp.allclose(out, ref, atol=2e-3, rtol=2e-3)

    print("KERNEL_OK")
</pallas_src>

<mosaic_0001>
module attributes {stable_mosaic.version = 11 : i64} {
  func.func @_attention_kernel(%arg0: i32, %arg1: memref<8x40x32xf32, #tpu.memory_space<vmem>>, %arg2: memref<8x32xf32, #tpu.memory_space<vmem>>, %arg3: memref<32x32xf32, #tpu.memory_space<vmem>>, %arg4: memref<32x32xf32, #tpu.memory_space<vmem>>, %arg5: memref<1x32xf32, #tpu.memory_space<vmem>>, %arg6: memref<1x32xf32, #tpu.memory_space<vmem>>, %arg7: memref<8x32xf32, #tpu.memory_space<vmem>>) attributes {dimension_semantics = [#tpu.dimension_semantics<parallel>], iteration_bounds = array<i64: 1>, scalar_prefetch = 0 : i64, scratch_operands = 0 : i64, tpu.core_type = #tpu.core_type<tc>, window_params = [{transform_indices = @transform_0, window_bounds = array<i64: 8, 40, 32>}, {transform_indices = @transform_1, window_bounds = array<i64: 8, 32>}, {pipeline_mode = #tpu.pipeline_mode<synchronous>, transform_indices = @transform_2, window_bounds = array<i64: 32, 32>}, {pipeline_mode = #tpu.pipeline_mode<synchronous>, transform_indices = @transform_3, window_bounds = array<i64: 32, 32>}, {pipeline_mode = #tpu.pipeline_mode<synchronous>, transform_indices = @transform_4, window_bounds = array<i64: 1, 32>}, {pipeline_mode = #tpu.pipeline_mode<synchronous>, transform_indices = @transform_5, window_bounds = array<i64: 1, 32>}, {transform_indices = @transform_6, window_bounds = array<i64: 8, 32>}]} {
    %c0 = arith.constant 0 : index
    %c0_0 = arith.constant 0 : index
    %c0_1 = arith.constant 0 : index
    %0 = vector.load %arg1[%c0, %c0_0, %c0_1] : memref<8x40x32xf32, #tpu.memory_space<vmem>>, vector<8x40x32xf32>
    %c0_2 = arith.constant 0 : index
    %c0_3 = arith.constant 0 : index
    %1 = vector.load %arg2[%c0_2, %c0_3] : memref<8x32xf32, #tpu.memory_space<vmem>>, vector<8x32xf32>
    %c0_4 = arith.constant 0 : index
    %c0_5 = arith.constant 0 : index
    %2 = vector.load %arg4[%c0_4, %c0_5] : memref<32x32xf32, #tpu.memory_space<vmem>>, vector<32x32xf32>
    %cst = arith.constant dense<0.000000e+00> : vector<8x32xf32>
    %3 = tpu.matmul %1, %2, %cst {dimension_numbers = #tpu.dot_dimension_numbers<[1], [0], [0], [1], [0, 0, 1, 1], [], []>} : vector<8x32xf32>, vector<32x32xf32>, vector<8x32xf32> -> vector<8x32xf32>
    %c0_6 = arith.constant 0 : index
    %c0_7 = arith.constant 0 : index
    %4 = vector.load %arg5[%c0_6, %c0_7] : memref<1x32xf32, #tpu.memory_space<vmem>>, vector<1x32xf32>
    %5 = vector.broadcast %4 : vector<1x32xf32> to vector<8x32xf32>
    %6 = arith.addf %3, %5 : vector<8x32xf32>
    %7 = vector.shape_cast %0 : vector<8x40x32xf32> to vector<320x32xf32>
    %c0_8 = arith.constant 0 : index
    %c0_9 = arith.constant 0 : index
    %8 = vector.load %arg3[%c0_8, %c0_9] : memref<32x32xf32, #tpu.memory_space<vmem>>, vector<32x32xf32>
    %cst_10 = arith.constant dense<0.000000e+00> : vector<320x32xf32>
    %9 = tpu.matmul %7, %8, %cst_10 {dimension_numbers = #tpu.dot_dimension_numbers<[1], [0], [0], [1], [0, 0, 1, 1], [], []>} : vector<320x32xf32>, vector<32x32xf32>, vector<320x32xf32> -> vector<320x32xf32>
    %10 = vector.shape_cast %9 : vector<320x32xf32> to vector<8x40x32xf32>
    %11 = vector.shape_cast %6 : vector<8x32xf32> to vector<8x1x32xf32>
    %12 = vector.broadcast %11 : vector<8x1x32xf32> to vector<8x40x32xf32>
    %13 = arith.addf %10, %12 : vector<8x40x32xf32>
    %cst_11 = arith.constant 0.000000e+00 : f32
    %14 = vector.broadcast %cst_11 : f32 to vector<8x40x32xf32>
    %15 = arith.maximumf %13, %14 : vector<8x40x32xf32>
    %c0_12 = arith.constant 0 : index
    %c0_13 = arith.constant 0 : index
    %16 = vector.load %arg6[%c0_12, %c0_13] : memref<1x32xf32, #tpu.memory_space<vmem>>, vector<1x32xf32>
    %17 = vector.shape_cast %16 : vector<1x32xf32> to vector<1x1x32xf32>
    %18 = vector.broadcast %17 : vector<1x1x32xf32> to vector<8x40x32xf32>
    %19 = arith.mulf %15, %18 : vector<8x40x32xf32>
    %cst_14 = arith.constant dense<0.000000e+00> : vector<8x40xf32>
    %20 = vector.multi_reduction <add>, %19, %cst_14 [2] : vector<8x40x32xf32> to vector<8x40xf32>
    %21 = tpu.iota {dimensions = array<i32: 1>} : vector<8x40xi32>
    %c36_i32 = arith.constant 36 : i32
    %22 = vector.broadcast %c36_i32 : i32 to vector<8x40xi32>
    %23 = arith.cmpi slt, %21, %22 : vector<8x40xi32>
    %cst_15 = arith.constant -1.000000e+30 : f32
    %24 = vector.broadcast %cst_15 : f32 to vector<8x40xf32>
    %25 = arith.select %23, %20, %24 : vector<8x40xi1>, vector<8x40xf32>
    %cst_16 = arith.constant dense<0xFF800000> : vector<8xf32>
    %26 = vector.multi_reduction <maximumf>, %25, %cst_16 [1] : vector<8x40xf32> to vector<8xf32>
    %27 = vector.shape_cast %26 : vector<8xf32> to vector<8x1xf32>
    %28 = vector.broadcast %27 : vector<8x1xf32> to vector<8x40xf32>
    %29 = arith.subf %25, %28 : vector<8x40xf32>
    %30 = math.exp %29 : vector<8x40xf32>
    %cst_17 = arith.constant dense<0.000000e+00> : vector<8xf32>
    %31 = vector.multi_reduction <add>, %30, %cst_17 [1] : vector<8x40xf32> to vector<8xf32>
    %32 = vector.shape_cast %31 : vector<8xf32> to vector<8x1xf32>
    %33 = tpu.reciprocal %32 {approx = true} : vector<8x1xf32> -> vector<8x1xf32>
    %34 = vector.broadcast %33 : vector<8x1xf32> to vector<8x40xf32>
    %35 = arith.mulf %30, %34 : vector<8x40xf32>
    %36 = vector.shape_cast %35 : vector<8x40xf32> to vector<8x40x1xf32>
    %37 = vector.broadcast %36 : vector<8x40x1xf32> to vector<8x40x32xf32>
    %38 = arith.mulf %0, %37 : vector<8x40x32xf32>
    %cst_18 = arith.constant dense<0.000000e+00> : vector<8x32xf32>
    %39 = vector.multi_reduction <add>, %38, %cst_18 [1] : vector<8x40x32xf32> to vector<8x32xf32>
    %c0_19 = arith.constant 0 : index
    %c0_20 = arith.constant 0 : index
    %40 = vector.load %arg7[%c0_19, %c0_20] : memref<8x32xf32, #tpu.memory_space<vmem>>, vector<8x32xf32>
    tpu.vector_store %arg7[%c0_19, %c0_20], %39 {strides = array<i32>} : memref<8x32xf32, #tpu.memory_space<vmem>>, vector<8x32xf32>,
    return
  }
  func.func @transform_0(%arg0: i32) -> (i32, i32, i32) {
    %c0_i32 = arith.constant 0 : i32
    %c0_i32_0 = arith.constant 0 : i32
    %c0_i32_1 = arith.constant 0 : i32
    return %arg0, %c0_i32, %c0_i32_0 : i32, i32, i32
  }
  func.func @transform_1(%arg0: i32) -> (i32, i32) {
    %c0_i32 = arith.constant 0 : i32
    %c0_i32_0 = arith.constant 0 : i32
    return %arg0, %c0_i32 : i32, i32
  }
  func.func @transform_2(%arg0: i32) -> (i32, i32) {
    %c0_i32 = arith.constant 0 : i32
    %c0_i32_0 = arith.constant 0 : i32
    %c0_i32_1 = arith.constant 0 : i32
    return %c0_i32, %c0_i32_0 : i32, i32
  }
  func.func @transform_3(%arg0: i32) -> (i32, i32) {
    %c0_i32 = arith.constant 0 : i32
    %c0_i32_0 = arith.constant 0 : i32
    %c0_i32_1 = arith.constant 0 : i32
    return %c0_i32, %c0_i32_0 : i32, i32
  }
  func.func @transform_4(%arg0: i32) -> (i32, i32) {
    %c0_i32 = arith.constant 0 : i32
    %c0_i32_0 = arith.constant 0 : i32
    %c0_i32_1 = arith.constant 0 : i32
    return %c0_i32, %c0_i32_0 : i32, i32
  }
  func.func @transform_5(%arg0: i32) -> (i32, i32) {
    %c0_i32 = arith.constant 0 : i32
    %c0_i32_0 = arith.constant 0 : i32
    %c0_i32_1 = arith.constant 0 : i32
    return %c0_i32, %c0_i32_0 : i32, i32
  }
  func.func @transform_6(%arg0: i32) -> (i32, i32) {
    %c0_i32 = arith.constant 0 : i32
    %c0_i32_0 = arith.constant 0 : i32
    return %arg0, %c0_i32 : i32, i32
  }
}

</mosaic_0001>

<llo_original>
// kernel: tpu_custom_call.1
$region0: #{tpu_custom_call.1}
  #allocation0 [shape = 'u32[]', space=smem, size = 0x4, offset = 0x4, fixed_abs, tag = 'smem constant byte address 0x4 - core index']
  #allocation1 [shape = 'u32[72,128]{1,0:T(1,128)}', space=vmem, size = 0x9000, scoped, tag = 'internal scratch']
  %s0 = inlined_call_operand.vmem [shape: f32[8,40,32], index: 0, kind: input, shape index: {}]
  %s1 = inlined_call_operand.vmem [shape: f32[8,32], index: 1, kind: input, shape index: {}]
  %s2 = inlined_call_operand.vmem [shape: f32[32,32], index: 2, kind: input, shape index: {}]
  %s3 = inlined_call_operand.vmem [shape: f32[32,32], index: 3, kind: input, shape index: {}]
  %s4 = inlined_call_operand.vmem [shape: f32[1,32], index: 4, kind: input, shape index: {}]
  %s5 = inlined_call_operand.vmem [shape: f32[1,32], index: 5, kind: input, shape index: {}]
  %s6 = inlined_call_operand.hbm [shape: f32[8,32], index: 6, kind: output, shape index: {}]
  %s7 = sld [smem:[#allocation0]]
  $region34: #{tpu_custom_call.1} parent=0
    _
  %s9 = ssub.s32 1, %s7
  %s10 = scalar_select 0, %s9, %s7
  $region1: #{tpu_custom_call.1} parent=0
    #allocation2 [shape = 'u8[4096]{0}', space=vmem, size = 0x1000, scoped, tag = 'output window, operand 0, single buffered']
    #allocation3 [shape = 's32[1]{0}', space=sflag, size = 0x4, scoped, tag = 'scoped memory for tpu_custom_call.1']
    %11 = vsyncpa [#allocation3], 0
    // Predicated region
    $region2: #{tpu_custom_call.1} parent=1 // pred_check
      _
    $region3: #{tpu_custom_call.1} parent=1 // pred_check_branch
      %13 = sbr.rel (0) target = $region5
    $region4: #{tpu_custom_call.1} parent=1 // pred_region
      _
    $region5: #{tpu_custom_call.1} parent=1 // pred_fallthru
      _
    // Predicated region
    $region6: #{tpu_custom_call.1} parent=1 // pred_check
      _
    $region7: #{tpu_custom_call.1} parent=1 // pred_check_branch
      %15 = sbr.rel (0) target = $region9
    $region8: #{tpu_custom_call.1} parent=1 // pred_region
      _
    $region9: #{tpu_custom_call.1} parent=1 // pred_fallthru
      _
    // Predicated region
    $region10: #{tpu_custom_call.1} parent=1 // pred_check
      _
    $region11: #{tpu_custom_call.1} parent=1 // pred_check_branch
      %17 = sbr.rel (0) target = $region13
    $region12: #{tpu_custom_call.1} parent=1 // pred_region
      _
    $region13: #{tpu_custom_call.1} parent=1 // pred_fallthru
      _
    // Predicated region
    $region14: #{tpu_custom_call.1} parent=1 // pred_check
      _
    $region15: #{tpu_custom_call.1} parent=1 // pred_check_branch
      %19 = sbr.rel (0) target = $region17
    $region16: #{tpu_custom_call.1} parent=1 // pred_region
      _
    $region17: #{tpu_custom_call.1} parent=1 // pred_fallthru
      _
    // Predicated region
    $region18: #{tpu_custom_call.1} parent=1 // pred_check
      _
    $region19: #{tpu_custom_call.1} parent=1 // pred_check_branch
      %21 = sbr.rel (0) target = $region21
    $region20: #{tpu_custom_call.1} parent=1 // pred_region
      _
    $region21: #{tpu_custom_call.1} parent=1 // pred_fallthru
      _
    // Predicated region
    $region22: #{tpu_custom_call.1} parent=1 // pred_check
      _
    $region23: #{tpu_custom_call.1} parent=1 // pred_check_branch
      %23 = sbr.rel (0) target = $region25
    $region24: #{tpu_custom_call.1} parent=1 // pred_region
      _
    $region25: #{tpu_custom_call.1} parent=1 // pred_fallthru
      _
    %v24 = vld [vmem:[%s0] sm:$0xff]
    %v25 = vld [vmem:[%s0 + $0x8] sm:$0xff]
    %v26 = vld [vmem:[%s0 + $0x10] sm:$0xff]
    %v27 = vld [vmem:[%s0 + $0x18] sm:$0xff]
    %v28 = vld [vmem:[%s0 + $0x20] sm:$0xff]
    %v29 = vld [vmem:[%s0 + $0x28] sm:$0xff]
    %v30 = vld [vmem:[%s0 + $0x30] sm:$0xff]
    %v31 = vld [vmem:[%s0 + $0x38] sm:$0xff]
    %v32 = vld [vmem:[%s0 + $0x40] sm:$0xff]
    %v33 = vld [vmem:[%s0 + $0x48] sm:$0xff]
    %v34 = vld [vmem:[%s0 + $0x50] sm:$0xff]
    %v35 = vld [vmem:[%s0 + $0x58] sm:$0xff]
    %v36 = vld [vmem:[%s0 + $0x60] sm:$0xff]
    %v37 = vld [vmem:[%s0 + $0x68] sm:$0xff]
    %v38 = vld [vmem:[%s0 + $0x70] sm:$0xff]
    %v39 = vld [vmem:[%s0 + $0x78] sm:$0xff]
    %v40 = vld [vmem:[%s0 + $0x80] sm:$0xff]
    %v41 = vld [vmem:[%s0 + $0x88] sm:$0xff]
    %v42 = vld [vmem:[%s0 + $0x90] sm:$0xff]
    %v43 = vld [vmem:[%s0 + $0x98] sm:$0xff]
    %v44 = vld [vmem:[%s0 + $0xa0] sm:$0xff]
    %v45 = vld [vmem:[%s0 + $0xa8] sm:$0xff]
    %v46 = vld [vmem:[%s0 + $0xb0] sm:$0xff]
    %v47 = vld [vmem:[%s0 + $0xb8] sm:$0xff]
    %v48 = vld [vmem:[%s0 + $0xc0] sm:$0xff]
    %v49 = vld [vmem:[%s0 + $0xc8] sm:$0xff]
    %v50 = vld [vmem:[%s0 + $0xd0] sm:$0xff]
    %v51 = vld [vmem:[%s0 + $0xd8] sm:$0xff]
    %v52 = vld [vmem:[%s0 + $0xe0] sm:$0xff]
    %v53 = vld [vmem:[%s0 + $0xe8] sm:$0xff]
    %v54 = vld [vmem:[%s0 + $0xf0] sm:$0xff]
    %v55 = vld [vmem:[%s0 + $0xf8] sm:$0xff]
    %v56 = vld [vmem:[%s0 + $0x100] sm:$0xff]
    %v57 = vld [vmem:[%s0 + $0x108] sm:$0xff]
    %v58 = vld [vmem:[%s0 + $0x110] sm:$0xff]
    %v59 = vld [vmem:[%s0 + $0x118] sm:$0xff]
    %v60 = vld [vmem:[%s0 + $0x120] sm:$0xff]
    %v61 = vld [vmem:[%s0 + $0x128] sm:$0xff]
    %v62 = vld [vmem:[%s0 + $0x130] sm:$0xff]
    %v63 = vld [vmem:[%s0 + $0x138] sm:$0xff]
    %v64 = vld [vmem:[%s1] sm:$0xff]
    %v65 = vld [vmem:[%s3] sm:$0xff]
    %v66 = vld [vmem:[%s3 + $0x8] sm:$0xff]
    %v67 = vld [vmem:[%s3 + $0x10] sm:$0xff]
    %v68 = vld [vmem:[%s3 + $0x18] sm:$0xff]
    %v69 = vld [vmem:[%s4] sm:$0x1]
    %v71 = vperm.slane %v69, 0
    %vm73 = vcmask 261120
    %v75 = vsel %vm73, %v64, 0
    %77 = vmatpush.msra.mxu0 0.0
    %78 = vmatpush.msra.mxu0 0.0
    %79 = vmatpush.msra.mxu0 0.0
    %80 = vmatpush.msra.mxu0 0.0
    %81 = vmatpush.msra.mxu0 0.0
    %82 = vmatpush.msra.mxu0 0.0
    %83 = vmatpush.msra.mxu0 0.0
    %84 = vmatpush.msra.mxu0 0.0
    %85 = vmatpush.msra.mxu0 0.0
    %86 = vmatpush.msra.mxu0 0.0
    %87 = vmatpush.msra.mxu0 0.0
    %88 = vmatpush.msra.mxu0 0.0
    %89 = vmatpush.msra.mxu0 %v68
    %90 = vmatpush.msra.mxu0 %v67
    %91 = vmatpush.msra.mxu0 %v66
    %92 = vmatpush.msra.mxu0 %v65
    %93 = vmatmul.f32.gmra.mxu0 %v75
    %v94 = vpop.f32.mrf.mxu0
    %v95 = vadd.f32 %v71, %v94
    %96 = vdwg.mxu0
    %v97 = vld [vmem:[%s2] sm:$0xff]
    %v98 = vld [vmem:[%s2 + $0x8] sm:$0xff]
    %v99 = vld [vmem:[%s2 + $0x10] sm:$0xff]
    %v100 = vld [vmem:[%s2 + $0x18] sm:$0xff]
    %v102 = vsel %vm73, %v24, 0
    %v105 = vsel %vm73, %v25, 0
    %v108 = vsel %vm73, %v26, 0
    %v111 = vsel %vm73, %v27, 0
    %v114 = vsel %vm73, %v28, 0
    %v117 = vsel %vm73, %v29, 0
    %v120 = vsel %vm73, %v30, 0
    %v123 = vsel %vm73, %v31, 0
    %v126 = vsel %vm73, %v32, 0
    %v129 = vsel %vm73, %v33, 0
    %v132 = vsel %vm73, %v34, 0
    %v135 = vsel %vm73, %v35, 0
    %v138 = vsel %vm73, %v36, 0
    %v141 = vsel %vm73, %v37, 0
    %v144 = vsel %vm73, %v38, 0
    %v147 = vsel %vm73, %v39, 0
    %v150 = vsel %vm73, %v40, 0
    %v153 = vsel %vm73, %v41, 0
    %v156 = vsel %vm73, %v42, 0
    %v159 = vsel %vm73, %v43, 0
    %v162 = vsel %vm73, %v44, 0
    %v165 = vsel %vm73, %v45, 0
    %v168 = vsel %vm73, %v46, 0
    %v171 = vsel %vm73, %v47, 0
    %v174 = vsel %vm73, %v48, 0
    %v177 = vsel %vm73, %v49, 0
    %v180 = vsel %vm73, %v50, 0
    %v183 = vsel %vm73, %v51, 0
    %v186 = vsel %vm73, %v52, 0
    %v189 = vsel %vm73, %v53, 0
    %v192 = vsel %vm73, %v54, 0
    %v195 = vsel %vm73, %v55, 0
    %v198 = vsel %vm73, %v56, 0
    %v201 = vsel %vm73, %v57, 0
    %v204 = vsel %vm73, %v58, 0
    %v207 = vsel %vm73, %v59, 0
    %v210 = vsel %vm73, %v60, 0
    %v213 = vsel %vm73, %v61, 0
    %v216 = vsel %vm73, %v62, 0
    %v219 = vsel %vm73, %v63, 0
    %221 = vmatpush.msra.mxu0 0.0
    %222 = vmatpush.msra.mxu0 0.0
    %223 = vmatpush.msra.mxu0 0.0
    %224 = vmatpush.msra.mxu0 0.0
    %225 = vmatpush.msra.mxu0 0.0
    %226 = vmatpush.msra.mxu0 0.0
    %227 = vmatpush.msra.mxu0 0.0
    %228 = vmatpush.msra.mxu0 0.0
    %229 = vmatpush.msra.mxu0 0.0
    %230 = vmatpush.msra.mxu0 0.0
    %231 = vmatpush.msra.mxu0 0.0
    %232 = vmatpush.msra.mxu0 0.0
    %233 = vmatpush.msra.mxu0 %v100
    %234 = vmatpush.msra.mxu0 %v99
    %235 = vmatpush.msra.mxu0 %v98
    %236 = vmatpush.msra.mxu0 %v97
    %237 = vmatmul.f32.gmra.mxu0 %v102
    %v238 = vpop.f32.mrf.mxu0
    %v239 = vadd.f32 0.0, %v238
    %240 = vmatmul.f32.gmra.mxu0 %v105
    %v241 = vpop.f32.mrf.mxu0
    %v242 = vadd.f32 0.0, %v241
    %243 = vmatmul.f32.gmra.mxu0 %v108
    %v244 = vpop.f32.mrf.mxu0
    %v245 = vadd.f32 0.0, %v244
    %246 = vmatmul.f32.gmra.mxu0 %v111
    %v247 = vpop.f32.mrf.mxu0
    %v248 = vadd.f32 0.0, %v247
    %249 = vmatmul.f32.gmra.mxu0 %v114
    %v250 = vpop.f32.mrf.mxu0
    %v251 = vadd.f32 0.0, %v250
    %252 = vmatmul.f32.gmra.mxu0 %v117
    %v253 = vpop.f32.mrf.mxu0
    %v254 = vadd.f32 0.0, %v253
    %255 = vmatmul.f32.gmra.mxu0 %v120
    %v256 = vpop.f32.mrf.mxu0
    %v257 = vadd.f32 0.0, %v256
    %258 = vmatmul.f32.gmra.mxu0 %v123
    %v259 = vpop.f32.mrf.mxu0
    %v260 = vadd.f32 0.0, %v259
    %261 = vmatmul.f32.gmra.mxu0 %v126
    %v262 = vpop.f32.mrf.mxu0
    %v263 = vadd.f32 0.0, %v262
    %264 = vmatmul.f32.gmra.mxu0 %v129
    %v265 = vpop.f32.mrf.mxu0
    %v266 = vadd.f32 0.0, %v265
    %267 = vmatmul.f32.gmra.mxu0 %v132
    %v268 = vpop.f32.mrf.mxu0
    %v269 = vadd.f32 0.0, %v268
    %270 = vmatmul.f32.gmra.mxu0 %v135
    %v271 = vpop.f32.mrf.mxu0
    %v272 = vadd.f32 0.0, %v271
    %273 = vmatmul.f32.gmra.mxu0 %v138
    %v274 = vpop.f32.mrf.mxu0
    %v275 = vadd.f32 0.0, %v274
    %276 = vmatmul.f32.gmra.mxu0 %v141
    %v277 = vpop.f32.mrf.mxu0
    %v278 = vadd.f32 0.0, %v277
    %279 = vmatmul.f32.gmra.mxu0 %v144
    %v280 = vpop.f32.mrf.mxu0
    %v281 = vadd.f32 0.0, %v280
    %282 = vmatmul.f32.gmra.mxu0 %v147
    %v283 = vpop.f32.mrf.mxu0
    %v284 = vadd.f32 0.0, %v283
    %285 = vmatmul.f32.gmra.mxu0 %v150
    %v286 = vpop.f32.mrf.mxu0
    %v287 = vadd.f32 0.0, %v286
    %288 = vmatmul.f32.gmra.mxu0 %v153
    %v289 = vpop.f32.mrf.mxu0
    %v290 = vadd.f32 0.0, %v289
    %291 = vmatmul.f32.gmra.mxu0 %v156
    %v292 = vpop.f32.mrf.mxu0
    %v293 = vadd.f32 0.0, %v292
    %294 = vmatmul.f32.gmra.mxu0 %v159
    %v295 = vpop.f32.mrf.mxu0
    %v296 = vadd.f32 0.0, %v295
    %297 = vmatmul.f32.gmra.mxu0 %v162
    %v298 = vpop.f32.mrf.mxu0
    %v299 = vadd.f32 0.0, %v298
    %300 = vmatmul.f32.gmra.mxu0 %v165
    %v301 = vpop.f32.mrf.mxu0
    %v302 = vadd.f32 0.0, %v301
    %303 = vmatmul.f32.gmra.mxu0 %v168
    %v304 = vpop.f32.mrf.mxu0
    %v305 = vadd.f32 0.0, %v304
    %306 = vmatmul.f32.gmra.mxu0 %v171
    %v307 = vpop.f32.mrf.mxu0
    %v308 = vadd.f32 0.0, %v307
    %309 = vmatmul.f32.gmra.mxu0 %v174
    %v310 = vpop.f32.mrf.mxu0
    %v311 = vadd.f32 0.0, %v310
    %312 = vmatmul.f32.gmra.mxu0 %v177
    %v313 = vpop.f32.mrf.mxu0
    %v314 = vadd.f32 0.0, %v313
    %315 = vmatmul.f32.gmra.mxu0 %v180
    %v316 = vpop.f32.mrf.mxu0
    %v317 = vadd.f32 0.0, %v316
    %318 = vmatmul.f32.gmra.mxu0 %v183
    %v319 = vpop.f32.mrf.mxu0
    %v320 = vadd.f32 0.0, %v319
    %321 = vmatmul.f32.gmra.mxu0 %v186
    %v322 = vpop.f32.mrf.mxu0
    %v323 = vadd.f32 0.0, %v322
    %324 = vmatmul.f32.gmra.mxu0 %v189
    %v325 = vpop.f32.mrf.mxu0
    %v326 = vadd.f32 0.0, %v325
    %327 = vmatmul.f32.gmra.mxu0 %v192
    %v328 = vpop.f32.mrf.mxu0
    %v329 = vadd.f32 0.0, %v328
    %330 = vmatmul.f32.gmra.mxu0 %v195
    %v331 = vpop.f32.mrf.mxu0
    %v332 = vadd.f32 0.0, %v331
    %333 = vmatmul.f32.gmra.mxu0 %v198
    %v334 = vpop.f32.mrf.mxu0
    %v335 = vadd.f32 0.0, %v334
    %336 = vmatmul.f32.gmra.mxu0 %v201
    %v337 = vpop.f32.mrf.mxu0
    %v338 = vadd.f32 0.0, %v337
    %339 = vmatmul.f32.gmra.mxu0 %v204
    %v340 = vpop.f32.mrf.mxu0
    %v341 = vadd.f32 0.0, %v340
    %342 = vmatmul.f32.gmra.mxu0 %v207
    %v343 = vpop.f32.mrf.mxu0
    %v344 = vadd.f32 0.0, %v343
    %345 = vmatmul.f32.gmra.mxu0 %v210
    %v346 = vpop.f32.mrf.mxu0
    %v347 = vadd.f32 0.0, %v346
    %348 = vmatmul.f32.gmra.mxu0 %v213
    %v349 = vpop.f32.mrf.mxu0
    %v350 = vadd.f32 0.0, %v349
    %351 = vmatmul.f32.gmra.mxu0 %v216
    %v352 = vpop.f32.mrf.mxu0
    %v353 = vadd.f32 0.0, %v352
    %354 = vmatmul.f32.gmra.mxu0 %v219
    %v355 = vpop.f32.mrf.mxu0
    %v356 = vadd.f32 0.0, %v355
    %357 = vdwg.mxu0
    %v359 = vrot.slane %v95, 1
    %v360 = vrot.slane %v95, 2
    %v361 = vrot.slane %v95, 3
    %v362 = vrot.slane %v95, 4
    %v363 = vrot.slane %v95, 5
    %v364 = vrot.slane %v95, 6
    %v365 = vrot.slane %v95, 7
    %v366 = vperm.slane %v95, 0
    %v367 = vperm.slane %v359, 0
    %v368 = vperm.slane %v360, 0
    %v369 = vperm.slane %v361, 0
    %v370 = vperm.slane %v362, 0
    %v371 = vperm.slane %v363, 0
    %v372 = vperm.slane %v364, 0
    %v373 = vperm.slane %v365, 0
    %v382 = vadd.f32 %v239, %v366
    %v383 = vadd.f32 %v242, %v366
    %v384 = vadd.f32 %v245, %v366
    %v385 = vadd.f32 %v248, %v366
    %v386 = vadd.f32 %v251, %v366
    %v387 = vadd.f32 %v254, %v367
    %v388 = vadd.f32 %v257, %v367
    %v389 = vadd.f32 %v260, %v367
    %v390 = vadd.f32 %v263, %v367
    %v391 = vadd.f32 %v266, %v367
    %v392 = vadd.f32 %v269, %v368
    %v393 = vadd.f32 %v272, %v368
    %v394 = vadd.f32 %v275, %v368
    %v395 = vadd.f32 %v278, %v368
    %v396 = vadd.f32 %v281, %v368
    %v397 = vadd.f32 %v284, %v369
    %v398 = vadd.f32 %v287, %v369
    %v399 = vadd.f32 %v290, %v369
    %v400 = vadd.f32 %v293, %v369
    %v401 = vadd.f32 %v296, %v369
    %v402 = vadd.f32 %v299, %v370
    %v403 = vadd.f32 %v302, %v370
    %v404 = vadd.f32 %v305, %v370
    %v405 = vadd.f32 %v308, %v370
    %v406 = vadd.f32 %v311, %v370
    %v407 = vadd.f32 %v314, %v371
    %v408 = vadd.f32 %v317, %v371
    %v409 = vadd.f32 %v320, %v371
    %v410 = vadd.f32 %v323, %v371
    %v411 = vadd.f32 %v326, %v371
    %v412 = vadd.f32 %v329, %v372
    %v413 = vadd.f32 %v332, %v372
    %v414 = vadd.f32 %v335, %v372
    %v415 = vadd.f32 %v338, %v372
    %v416 = vadd.f32 %v341, %v372
    %v417 = vadd.f32 %v344, %v373
    %v418 = vadd.f32 %v347, %v373
    %v419 = vadd.f32 %v350, %v373
    %v420 = vadd.f32 %v353, %v373
    %v421 = vadd.f32 %v356, %v373
    %v422 = vmax.f32 %v382, 0.0
    %v423 = vmax.f32 %v383, 0.0
    %v424 = vmax.f32 %v384, 0.0
    %v425 = vmax.f32 %v385, 0.0
    %v426 = vmax.f32 %v386, 0.0
    %v427 = vmax.f32 %v387, 0.0
    %v428 = vmax.f32 %v388, 0.0
    %v429 = vmax.f32 %v389, 0.0
    %v430 = vmax.f32 %v390, 0.0
    %v431 = vmax.f32 %v391, 0.0
    %v432 = vmax.f32 %v392, 0.0
    %v433 = vmax.f32 %v393, 0.0
    %v434 = vmax.f32 %v394, 0.0
    %v435 = vmax.f32 %v395, 0.0
    %v436 = vmax.f32 %v396, 0.0
    %v437 = vmax.f32 %v397, 0.0
    %v438 = vmax.f32 %v398, 0.0
    %v439 = vmax.f32 %v399, 0.0
    %v440 = vmax.f32 %v400, 0.0
    %v441 = vmax.f32 %v401, 0.0
    %v442 = vmax.f32 %v402, 0.0
    %v443 = vmax.f32 %v403, 0.0
    %v444 = vmax.f32 %v404, 0.0
    %v445 = vmax.f32 %v405, 0.0
    %v446 = vmax.f32 %v406, 0.0
    %v447 = vmax.f32 %v407, 0.0
    %v448 = vmax.f32 %v408, 0.0
    %v449 = vmax.f32 %v409, 0.0
    %v450 = vmax.f32 %v410, 0.0
    %v451 = vmax.f32 %v411, 0.0
    %v452 = vmax.f32 %v412, 0.0
    %v453 = vmax.f32 %v413, 0.0
    %v454 = vmax.f32 %v414, 0.0
    %v455 = vmax.f32 %v415, 0.0
    %v456 = vmax.f32 %v416, 0.0
    %v457 = vmax.f32 %v417, 0.0
    %v458 = vmax.f32 %v418, 0.0
    %v459 = vmax.f32 %v419, 0.0
    %v460 = vmax.f32 %v420, 0.0
    %v461 = vmax.f32 %v421, 0.0
    %v462 = vld [vmem:[%s5] sm:$0x1]
    %v464 = vperm.slane %v462, 0
    %v466 = vmul.f32 %v422, %v464
    %v467 = vmul.f32 %v423, %v464
    %v468 = vmul.f32 %v424, %v464
    %v469 = vmul.f32 %v425, %v464
    %v470 = vmul.f32 %v426, %v464
    %v471 = vmul.f32 %v427, %v464
    %v472 = vmul.f32 %v428, %v464
    %v473 = vmul.f32 %v429, %v464
    %v474 = vmul.f32 %v430, %v464
    %v475 = vmul.f32 %v431, %v464
    %v476 = vmul.f32 %v432, %v464
    %v477 = vmul.f32 %v433, %v464
    %v478 = vmul.f32 %v434, %v464
    %v479 = vmul.f32 %v435, %v464
    %v480 = vmul.f32 %v436, %v464
    %v481 = vmul.f32 %v437, %v464
    %v482 = vmul.f32 %v438, %v464
    %v483 = vmul.f32 %v439, %v464
    %v484 = vmul.f32 %v440, %v464
    %v485 = vmul.f32 %v441, %v464
    %v486 = vmul.f32 %v442, %v464
    %v487 = vmul.f32 %v443, %v464
    %v488 = vmul.f32 %v444, %v464
    %v489 = vmul.f32 %v445, %v464
    %v490 = vmul.f32 %v446, %v464
    %v491 = vmul.f32 %v447, %v464
    %v492 = vmul.f32 %v448, %v464
    %v493 = vmul.f32 %v449, %v464
    %v494 = vmul.f32 %v450, %v464
    %v495 = vmul.f32 %v451, %v464
    %v496 = vmul.f32 %v452, %v464
    %v497 = vmul.f32 %v453, %v464
    %v498 = vmul.f32 %v454, %v464
    %v499 = vmul.f32 %v455, %v464
    %v500 = vmul.f32 %v456, %v464
    %v501 = vmul.f32 %v457, %v464
    %v502 = vmul.f32 %v458, %v464
    %v503 = vmul.f32 %v459, %v464
    %v504 = vmul.f32 %v460, %v464
    %v505 = vmul.f32 %v461, %v464
    %v506 = vsel %vm73, %v466, 0.0
    %507 = vadd.xlane.f32.xlu0 %v506
    %v508 = vpop.xlane.xlu0 %507
    %v509 = vsel %vm73, %v467, 0.0
    %510 = vadd.xlane.f32.xlu0 %v509
    %v511 = vpop.xlane.xlu0 %510
    %v512 = vsel %vm73, %v468, 0.0
    %513 = vadd.xlane.f32.xlu0 %v512
    %v514 = vpop.xlane.xlu0 %513
    %v515 = vsel %vm73, %v469, 0.0
    %516 = vadd.xlane.f32.xlu0 %v515
    %v517 = vpop.xlane.xlu0 %516
    %v518 = vsel %vm73, %v470, 0.0
    %519 = vadd.xlane.f32.xlu0 %v518
    %v520 = vpop.xlane.xlu0 %519
    %v521 = vsel %vm73, %v471, 0.0
    %522 = vadd.xlane.f32.xlu0 %v521
    %v523 = vpop.xlane.xlu0 %522
    %v524 = vsel %vm73, %v472, 0.0
    %525 = vadd.xlane.f32.xlu0 %v524
    %v526 = vpop.xlane.xlu0 %525
    %v527 = vsel %vm73, %v473, 0.0
    %528 = vadd.xlane.f32.xlu0 %v527
    %v529 = vpop.xlane.xlu0 %528
    %v530 = vsel %vm73, %v474, 0.0
    %531 = vadd.xlane.f32.xlu0 %v530
    %v532 = vpop.xlane.xlu0 %531
    %v533 = vsel %vm73, %v475, 0.0
    %534 = vadd.xlane.f32.xlu0 %v533
    %v535 = vpop.xlane.xlu0 %534
    %v536 = vsel %vm73, %v476, 0.0
    %537 = vadd.xlane.f32.xlu0 %v536
    %v538 = vpop.xlane.xlu0 %537
    %v539 = vsel %vm73, %v477, 0.0
    %540 = vadd.xlane.f32.xlu0 %v539
    %v541 = vpop.xlane.xlu0 %540
    %v542 = vsel %vm73, %v478, 0.0
    %543 = vadd.xlane.f32.xlu0 %v542
    %v544 = vpop.xlane.xlu0 %543
    %v545 = vsel %vm73, %v479, 0.0
    %546 = vadd.xlane.f32.xlu0 %v545
    %v547 = vpop.xlane.xlu0 %546
    %v548 = vsel %vm73, %v480, 0.0
    %549 = vadd.xlane.f32.xlu0 %v548
    %v550 = vpop.xlane.xlu0 %549
    %v551 = vsel %vm73, %v481, 0.0
    %552 = vadd.xlane.f32.xlu0 %v551
    %v553 = vpop.xlane.xlu0 %552
    %v554 = vsel %vm73, %v482, 0.0
    %555 = vadd.xlane.f32.xlu0 %v554
    %v556 = vpop.xlane.xlu0 %555
    %v557 = vsel %vm73, %v483, 0.0
    %558 = vadd.xlane.f32.xlu0 %v557
    %v559 = vpop.xlane.xlu0 %558
    %v560 = vsel %vm73, %v484, 0.0
    %561 = vadd.xlane.f32.xlu0 %v560
    %v562 = vpop.xlane.xlu0 %561
    %v563 = vsel %vm73, %v485, 0.0
    %564 = vadd.xlane.f32.xlu0 %v563
    %v565 = vpop.xlane.xlu0 %564
    %v566 = vsel %vm73, %v486, 0.0
    %567 = vadd.xlane.f32.xlu0 %v566
    %v568 = vpop.xlane.xlu0 %567
    %v569 = vsel %vm73, %v487, 0.0
    %570 = vadd.xlane.f32.xlu0 %v569
    %v571 = vpop.xlane.xlu0 %570
    %v572 = vsel %vm73, %v488, 0.0
    %573 = vadd.xlane.f32.xlu0 %v572
    %v574 = vpop.xlane.xlu0 %573
    %v575 = vsel %vm73, %v489, 0.0
    %576 = vadd.xlane.f32.xlu0 %v575
    %v577 = vpop.xlane.xlu0 %576
    %v578 = vsel %vm73, %v490, 0.0
    %579 = vadd.xlane.f32.xlu0 %v578
    %v580 = vpop.xlane.xlu0 %579
    %v581 = vsel %vm73, %v491, 0.0
    %582 = vadd.xlane.f32.xlu0 %v581
    %v583 = vpop.xlane.xlu0 %582
    %v584 = vsel %vm73, %v492, 0.0
    %585 = vadd.xlane.f32.xlu0 %v584
    %v586 = vpop.xlane.xlu0 %585
    %v587 = vsel %vm73, %v493, 0.0
    %588 = vadd.xlane.f32.xlu0 %v587
    %v589 = vpop.xlane.xlu0 %588
    %v590 = vsel %vm73, %v494, 0.0
    %591 = vadd.xlane.f32.xlu0 %v590
    %v592 = vpop.xlane.xlu0 %591
    %v593 = vsel %vm73, %v495, 0.0
    %594 = vadd.xlane.f32.xlu0 %v593
    %v595 = vpop.xlane.xlu0 %594
    %v596 = vsel %vm73, %v496, 0.0
    %597 = vadd.xlane.f32.xlu0 %v596
    %v598 = vpop.xlane.xlu0 %597
    %v599 = vsel %vm73, %v497, 0.0
    %600 = vadd.xlane.f32.xlu0 %v599
    %v601 = vpop.xlane.xlu0 %600
    %v602 = vsel %vm73, %v498, 0.0
    %603 = vadd.xlane.f32.xlu0 %v602
    %v604 = vpop.xlane.xlu0 %603
    %v605 = vsel %vm73, %v499, 0.0
    %606 = vadd.xlane.f32.xlu0 %v605
    %v607 = vpop.xlane.xlu0 %606
    %v608 = vsel %vm73, %v500, 0.0
    %609 = vadd.xlane.f32.xlu0 %v608
    %v610 = vpop.xlane.xlu0 %609
    %v611 = vsel %vm73, %v501, 0.0
    %612 = vadd.xlane.f32.xlu0 %v611
    %v613 = vpop.xlane.xlu0 %612
    %v614 = vsel %vm73, %v502, 0.0
    %615 = vadd.xlane.f32.xlu0 %v614
    %v616 = vpop.xlane.xlu0 %615
    %v617 = vsel %vm73, %v503, 0.0
    %618 = vadd.xlane.f32.xlu0 %v617
    %v619 = vpop.xlane.xlu0 %618
    %v620 = vsel %vm73, %v504, 0.0
    %621 = vadd.xlane.f32.xlu0 %v620
    %v622 = vpop.xlane.xlu0 %621
    %v623 = vsel %vm73, %v505, 0.0
    %624 = vadd.xlane.f32.xlu0 %v623
    %v625 = vpop.xlane.xlu0 %624
    %v626 = vlaneseq
    %v627 = vand.u32 %v626, 127
    %vm628 = vcmp.lt.s32.totalorder %v627, 36
    %v669 = vperm.slane %v508, %v627
    %v670 = vadd.s32 %v627, 4294967288
    %v671 = vperm.slane %v511, %v670
    %vm672 = vcmask 130112
    %v673 = vsel %vm672, %v671, %v669
    %v674 = vadd.s32 %v627, 4294967280
    %v675 = vperm.slane %v514, %v674
    %vm676 = vcmask 195712
    %v677 = vsel %vm676, %v675, %v673
    %v678 = vadd.s32 %v627, 4294967272
    %v679 = vperm.slane %v517, %v678
    %vm680 = vcmask 261312
    %v681 = vsel %vm680, %v679, %v677
    %v682 = vadd.s32 %v627, 4294967264
    %v683 = vperm.slane %v520, %v682
    %vm684 = vcmask 326912
    %v685 = vsel %vm684, %v683, %v681
    %v686 = vperm.slane %v523, %v627
    %v687 = vperm.slane %v526, %v670
    %v688 = vsel %vm672, %v687, %v686
    %v689 = vperm.slane %v529, %v674
    %v690 = vsel %vm676, %v689, %v688
    %v691 = vperm.slane %v532, %v678
    %v692 = vsel %vm680, %v691, %v690
    %v693 = vperm.slane %v535, %v682
    %v694 = vsel %vm684, %v693, %v692
    %v695 = vperm.slane %v538, %v627
    %v696 = vperm.slane %v541, %v670
    %v697 = vsel %vm672, %v696, %v695
    %v698 = vperm.slane %v544, %v674
    %v699 = vsel %vm676, %v698, %v697
    %v700 = vperm.slane %v547, %v678
    %v701 = vsel %vm680, %v700, %v699
    %v702 = vperm.slane %v550, %v682
    %v703 = vsel %vm684, %v702, %v701
    %v704 = vperm.slane %v553, %v627
    %v705 = vperm.slane %v556, %v670
    %v706 = vsel %vm672, %v705, %v704
    %v707 = vperm.slane %v559, %v674
    %v708 = vsel %vm676, %v707, %v706
    %v709 = vperm.slane %v562, %v678
    %v710 = vsel %vm680, %v709, %v708
    %v711 = vperm.slane %v565, %v682
    %v712 = vsel %vm684, %v711, %v710
    %v713 = vperm.slane %v568, %v627
    %v714 = vperm.slane %v571, %v670
    %v715 = vsel %vm672, %v714, %v713
    %v716 = vperm.slane %v574, %v674
    %v717 = vsel %vm676, %v716, %v715
    %v718 = vperm.slane %v577, %v678
    %v719 = vsel %vm680, %v718, %v717
    %v720 = vperm.slane %v580, %v682
    %v721 = vsel %vm684, %v720, %v719
    %v722 = vperm.slane %v583, %v627
    %v723 = vperm.slane %v586, %v670
    %v724 = vsel %vm672, %v723, %v722
    %v725 = vperm.slane %v589, %v674
    %v726 = vsel %vm676, %v725, %v724
    %v727 = vperm.slane %v592, %v678
    %v728 = vsel %vm680, %v727, %v726
    %v729 = vperm.slane %v595, %v682
    %v730 = vsel %vm684, %v729, %v728
    %v731 = vperm.slane %v598, %v627
    %v732 = vperm.slane %v601, %v670
    %v733 = vsel %vm672, %v732, %v731
    %v734 = vperm.slane %v604, %v674
    %v735 = vsel %vm676, %v734, %v733
    %v736 = vperm.slane %v607, %v678
    %v737 = vsel %vm680, %v736, %v735
    %v738 = vperm.slane %v610, %v682
    %v739 = vsel %vm684, %v738, %v737
    %v740 = vperm.slane %v613, %v627
    %v741 = vperm.slane %v616, %v670
    %v742 = vsel %vm672, %v741, %v740
    %v743 = vperm.slane %v619, %v674
    %v744 = vsel %vm676, %v743, %v742
    %v745 = vperm.slane %v622, %v678
    %v746 = vsel %vm680, %v745, %v744
    %v747 = vperm.slane %v625, %v682
    %v748 = vsel %vm684, %v747, %v746
    %vm749 = vcmask 1041409
    %v750 = vsel %vm749, %v694, %v685
    %vm751 = vcmask 1042434
    %v752 = vsel %vm751, %v703, %v750
    %vm753 = vcmask 1043459
    %v754 = vsel %vm753, %v712, %v752
    %vm755 = vcmask 1044484
    %v756 = vsel %vm755, %v721, %v754
    %vm757 = vcmask 1045509
    %v758 = vsel %vm757, %v730, %v756
    %vm759 = vcmask 1046534
    %v760 = vsel %vm759, %v739, %v758
    %vm761 = vcmask 1047559
    %v762 = vsel %vm761, %v748, %v760
    %v764 = vsel %vm628, %v762, -1e+30
    %vm765 = vcmask 326656
    %v766 = vsel %vm765, %v764, -inf
    %767 = vmax.xlane.f32.xlu0 %v766
    %v768 = vpop.xlane.xlu0 %767
    %v769 = vsub.f32 %v764, %v768
    %v770 = vmul.f32 %v769, 1.442695
    %v771 = vpow.pop %v770
    %v772 = vsel %vm765, %v771, 0.0
    %773 = vadd.xlane.f32.xlu0 %v772
    %v774 = vpop.xlane.xlu0 %773
    %v775 = vrcp.pop %v774
    %v776 = vmul.f32 %v771, %v775
    %v777 = vperm.slane %v776, 0
    %v778 = vlaneseq
    %v779 = vshrl.u32 %v778, 7
    %781 = vset.pattern.permute.xlu0 %v779
    %782 = vperm.xlu0 %781, %v777
    %v783 = vpop.permute.xlu0 %782
    %v784 = vlaneseq
    %v785 = vshrl.u32 %v784, 7
    %v786 = vadd.s32 %v785, 8
    %787 = vset.pattern.permute.xlu0 %v786
    %788 = vperm.xlu0 %787, %v777
    %v789 = vpop.permute.xlu0 %788
    %v790 = vlaneseq
    %v791 = vshrl.u32 %v790, 7
    %v792 = vadd.s32 %v791, 16
    %793 = vset.pattern.permute.xlu0 %v792
    %794 = vperm.xlu0 %793, %v777
    %v795 = vpop.permute.xlu0 %794
    %v796 = vlaneseq
    %v797 = vshrl.u32 %v796, 7
    %v798 = vadd.s32 %v797, 24
    %799 = vset.pattern.permute.xlu0 %v798
    %800 = vperm.xlu0 %799, %v777
    %v801 = vpop.permute.xlu0 %800
    %v802 = vlaneseq
    %v803 = vshrl.u32 %v802, 7
    %v804 = vadd.s32 %v803, 32
    %805 = vset.pattern.permute.xlu0 %v804
    %806 = vperm.xlu0 %805, %v777
    %v807 = vpop.permute.xlu0 %806
    %v808 = vperm.slane %v776, 1
    %v809 = vlaneseq
    %v810 = vshrl.u32 %v809, 7
    %812 = vset.pattern.permute.xlu0 %v810
    %813 = vperm.xlu0 %812, %v808
    %v814 = vpop.permute.xlu0 %813
    %v815 = vlaneseq
    %v816 = vshrl.u32 %v815, 7
    %v817 = vadd.s32 %v816, 8
    %818 = vset.pattern.permute.xlu0 %v817
    %819 = vperm.xlu0 %818, %v808
    %v820 = vpop.permute.xlu0 %819
    %v821 = vlaneseq
    %v822 = vshrl.u32 %v821, 7
    %v823 = vadd.s32 %v822, 16
    %824 = vset.pattern.permute.xlu0 %v823
    %825 = vperm.xlu0 %824, %v808
    %v826 = vpop.permute.xlu0 %825
    %v827 = vlaneseq
    %v828 = vshrl.u32 %v827, 7
    %v829 = vadd.s32 %v828, 24
    %830 = vset.pattern.permute.xlu0 %v829
    %831 = vperm.xlu0 %830, %v808
    %v832 = vpop.permute.xlu0 %831
    %v833 = vlaneseq
    %v834 = vshrl.u32 %v833, 7
    %v835 = vadd.s32 %v834, 32
    %836 = vset.pattern.permute.xlu0 %v835
    %837 = vperm.xlu0 %836, %v808
    %v838 = vpop.permute.xlu0 %837
    %v839 = vperm.slane %v776, 2
    %v840 = vlaneseq
    %v841 = vshrl.u32 %v840, 7
    %843 = vset.pattern.permute.xlu0 %v841
    %844 = vperm.xlu0 %843, %v839
    %v845 = vpop.permute.xlu0 %844
    %v846 = vlaneseq
    %v847 = vshrl.u32 %v846, 7
    %v848 = vadd.s32 %v847, 8
    %849 = vset.pattern.permute.xlu0 %v848
    %850 = vperm.xlu0 %849, %v839
    %v851 = vpop.permute.xlu0 %850
    %v852 = vlaneseq
    %v853 = vshrl.u32 %v852, 7
    %v854 = vadd.s32 %v853, 16
    %855 = vset.pattern.permute.xlu0 %v854
    %856 = vperm.xlu0 %855, %v839
    %v857 = vpop.permute.xlu0 %856
    %v858 = vlaneseq
    %v859 = vshrl.u32 %v858, 7
    %v860 = vadd.s32 %v859, 24
    %861 = vset.pattern.permute.xlu0 %v860
    %862 = vperm.xlu0 %861, %v839
    %v863 = vpop.permute.xlu0 %862
    %v864 = vlaneseq
    %v865 = vshrl.u32 %v864, 7
    %v866 = vadd.s32 %v865, 32
    %867 = vset.pattern.permute.xlu0 %v866
    %868 = vperm.xlu0 %867, %v839
    %v869 = vpop.permute.xlu0 %868
    %v870 = vperm.slane %v776, 3
    %v871 = vlaneseq
    %v872 = vshrl.u32 %v871, 7
    %874 = vset.pattern.permute.xlu0 %v872
    %875 = vperm.xlu0 %874, %v870
    %v876 = vpop.permute.xlu0 %875
    %v877 = vlaneseq
    %v878 = vshrl.u32 %v877, 7
    %v879 = vadd.s32 %v878, 8
    %880 = vset.pattern.permute.xlu0 %v879
    %881 = vperm.xlu0 %880, %v870
    %v882 = vpop.permute.xlu0 %881
    %v883 = vlaneseq
    %v884 = vshrl.u32 %v883, 7
    %v885 = vadd.s32 %v884, 16
    %886 = vset.pattern.permute.xlu0 %v885
    %887 = vperm.xlu0 %886, %v870
    %v888 = vpop.permute.xlu0 %887
    %v889 = vlaneseq
    %v890 = vshrl.u32 %v889, 7
    %v891 = vadd.s32 %v890, 24
    %892 = vset.pattern.permute.xlu0 %v891
    %893 = vperm.xlu0 %892, %v870
    %v894 = vpop.permute.xlu0 %893
    %v895 = vlaneseq
    %v896 = vshrl.u32 %v895, 7
    %v897 = vadd.s32 %v896, 32
    %898 = vset.pattern.permute.xlu0 %v897
    %899 = vperm.xlu0 %898, %v870
    %v900 = vpop.permute.xlu0 %899
    %v901 = vperm.slane %v776, 4
    %v902 = vlaneseq
    %v903 = vshrl.u32 %v902, 7
    %905 = vset.pattern.permute.xlu0 %v903
    %906 = vperm.xlu0 %905, %v901
    %v907 = vpop.permute.xlu0 %906
    %v908 = vlaneseq
    %v909 = vshrl.u32 %v908, 7
    %v910 = vadd.s32 %v909, 8
    %911 = vset.pattern.permute.xlu0 %v910
    %912 = vperm.xlu0 %911, %v901
    %v913 = vpop.permute.xlu0 %912
    %v914 = vlaneseq
    %v915 = vshrl.u32 %v914, 7
    %v916 = vadd.s32 %v915, 16
    %917 = vset.pattern.permute.xlu0 %v916
    %918 = vperm.xlu0 %917, %v901
    %v919 = vpop.permute.xlu0 %918
    %v920 = vlaneseq
    %v921 = vshrl.u32 %v920, 7
    %v922 = vadd.s32 %v921, 24
    %923 = vset.pattern.permute.xlu0 %v922
    %924 = vperm.xlu0 %923, %v901
    %v925 = vpop.permute.xlu0 %924
    %v926 = vlaneseq
    %v927 = vshrl.u32 %v926, 7
    %v928 = vadd.s32 %v927, 32
    %929 = vset.pattern.permute.xlu0 %v928
    %930 = vperm.xlu0 %929, %v901
    %v931 = vpop.permute.xlu0 %930
    %v932 = vperm.slane %v776, 5
    %v933 = vlaneseq
    %v934 = vshrl.u32 %v933, 7
    %936 = vset.pattern.permute.xlu0 %v934
    %937 = vperm.xlu0 %936, %v932
    %v938 = vpop.permute.xlu0 %937
    %v939 = vlaneseq
    %v940 = vshrl.u32 %v939, 7
    %v941 = vadd.s32 %v940, 8
    %942 = vset.pattern.permute.xlu0 %v941
    %943 = vperm.xlu0 %942, %v932
    %v944 = vpop.permute.xlu0 %943
    %v945 = vlaneseq
    %v946 = vshrl.u32 %v945, 7
    %v947 = vadd.s32 %v946, 16
    %948 = vset.pattern.permute.xlu0 %v947
    %949 = vperm.xlu0 %948, %v932
    %v950 = vpop.permute.xlu0 %949
    %v951 = vlaneseq
    %v952 = vshrl.u32 %v951, 7
    %v953 = vadd.s32 %v952, 24
    %954 = vset.pattern.permute.xlu0 %v953
    %955 = vperm.xlu0 %954, %v932
    %v956 = vpop.permute.xlu0 %955
    %v957 = vlaneseq
    %v958 = vshrl.u32 %v957, 7
    %v959 = vadd.s32 %v958, 32
    %960 = vset.pattern.permute.xlu0 %v959
    %961 = vperm.xlu0 %960, %v932
    %v962 = vpop.permute.xlu0 %961
    %v963 = vperm.slane %v776, 6
    %v964 = vlaneseq
    %v965 = vshrl.u32 %v964, 7
    %967 = vset.pattern.permute.xlu0 %v965
    %968 = vperm.xlu0 %967, %v963
    %v969 = vpop.permute.xlu0 %968
    %v970 = vlaneseq
    %v971 = vshrl.u32 %v970, 7
    %v972 = vadd.s32 %v971, 8
    %973 = vset.pattern.permute.xlu0 %v972
    %974 = vperm.xlu0 %973, %v963
    %v975 = vpop.permute.xlu0 %974
    %v976 = vlaneseq
    %v977 = vshrl.u32 %v976, 7
    %v978 = vadd.s32 %v977, 16
    %979 = vset.pattern.permute.xlu0 %v978
    %980 = vperm.xlu0 %979, %v963
    %v981 = vpop.permute.xlu0 %980
    %v982 = vlaneseq
    %v983 = vshrl.u32 %v982, 7
    %v984 = vadd.s32 %v983, 24
    %985 = vset.pattern.permute.xlu0 %v984
    %986 = vperm.xlu0 %985, %v963
    %v987 = vpop.permute.xlu0 %986
    %v988 = vlaneseq
    %v989 = vshrl.u32 %v988, 7
    %v990 = vadd.s32 %v989, 32
    %991 = vset.pattern.permute.xlu0 %v990
    %992 = vperm.xlu0 %991, %v963
    %v993 = vpop.permute.xlu0 %992
    %v994 = vperm.slane %v776, 7
    %v995 = vlaneseq
    %v996 = vshrl.u32 %v995, 7
    %998 = vset.pattern.permute.xlu0 %v996
    %999 = vperm.xlu0 %998, %v994
    %v1000 = vpop.permute.xlu0 %999
    %v1001 = vlaneseq
    %v1002 = vshrl.u32 %v1001, 7
    %v1003 = vadd.s32 %v1002, 8
    %1004 = vset.pattern.permute.xlu0 %v1003
    %1005 = vperm.xlu0 %1004, %v994
    %v1006 = vpop.permute.xlu0 %1005
    %v1007 = vlaneseq
    %v1008 = vshrl.u32 %v1007, 7
    %v1009 = vadd.s32 %v1008, 16
    %1010 = vset.pattern.permute.xlu0 %v1009
    %1011 = vperm.xlu0 %1010, %v994
    %v1012 = vpop.permute.xlu0 %1011
    %v1013 = vlaneseq
    %v1014 = vshrl.u32 %v1013, 7
    %v1015 = vadd.s32 %v1014, 24
    %1016 = vset.pattern.permute.xlu0 %v1015
    %1017 = vperm.xlu0 %1016, %v994
    %v1018 = vpop.permute.xlu0 %1017
    %v1019 = vlaneseq
    %v1020 = vshrl.u32 %v1019, 7
    %v1021 = vadd.s32 %v1020, 32
    %1022 = vset.pattern.permute.xlu0 %v1021
    %1023 = vperm.xlu0 %1022, %v994
    %v1024 = vpop.permute.xlu0 %1023
    %v1025 = vmul.f32 %v24, %v783
    %v1026 = vmul.f32 %v25, %v789
    %v1027 = vmul.f32 %v26, %v795
    %v1028 = vmul.f32 %v27, %v801
    %v1029 = vmul.f32 %v28, %v807
    %v1030 = vmul.f32 %v29, %v814
    %v1031 = vmul.f32 %v30, %v820
    %v1032 = vmul.f32 %v31, %v826
    %v1033 = vmul.f32 %v32, %v832
    %v1034 = vmul.f32 %v33, %v838
    %v1035 = vmul.f32 %v34, %v845
    %v1036 = vmul.f32 %v35, %v851
    %v1037 = vmul.f32 %v36, %v857
    %v1038 = vmul.f32 %v37, %v863
    %v1039 = vmul.f32 %v38, %v869
    %v1040 = vmul.f32 %v39, %v876
    %v1041 = vmul.f32 %v40, %v882
    %v1042 = vmul.f32 %v41, %v888
    %v1043 = vmul.f32 %v42, %v894
    %v1044 = vmul.f32 %v43, %v900
    %v1045 = vmul.f32 %v44, %v907
    %v1046 = vmul.f32 %v45, %v913
    %v1047 = vmul.f32 %v46, %v919
    %v1048 = vmul.f32 %v47, %v925
    %v1049 = vmul.f32 %v48, %v931
    %v1050 = vmul.f32 %v49, %v938
    %v1051 = vmul.f32 %v50, %v944
    %v1052 = vmul.f32 %v51, %v950
    %v1053 = vmul.f32 %v52, %v956
    %v1054 = vmul.f32 %v53, %v962
    %v1055 = vmul.f32 %v54, %v969
    %v1056 = vmul.f32 %v55, %v975
    %v1057 = vmul.f32 %v56, %v981
    %v1058 = vmul.f32 %v57, %v987
    %v1059 = vmul.f32 %v58, %v993
    %v1060 = vmul.f32 %v59, %v1000
    %v1061 = vmul.f32 %v60, %v1006
    %v1062 = vmul.f32 %v61, %v1012
    %v1063 = vmul.f32 %v62, %v1018
    %v1064 = vmul.f32 %v63, %v1024
    %v1065 = vsel %vm73, %v1025, 0.0
    %v1066 = vsel %vm73, %v1026, 0.0
    %v1067 = vadd.f32 %v1065, %v1066
    %v1068 = vsel %vm73, %v1027, 0.0
    %v1069 = vadd.f32 %v1067, %v1068
    %v1070 = vsel %vm73, %v1028, 0.0
    %v1071 = vadd.f32 %v1069, %v1070
    %v1072 = vsel %vm73, %v1029, 0.0
    %v1073 = vadd.f32 %v1071, %v1072
    %v1074 = vrot.slane %v1073, 4
    %v1075 = vadd.f32 %v1073, %v1074
    %v1076 = vrot.slane %v1075, 2
    %v1077 = vadd.f32 %v1075, %v1076
    %v1078 = vrot.slane %v1077, 1
    %v1079 = vadd.f32 %v1077, %v1078
    %v1080 = vsel %vm73, %v1030, 0.0
    %v1081 = vsel %vm73, %v1031, 0.0
    %v1082 = vadd.f32 %v1080, %v1081
    %v1083 = vsel %vm73, %v1032, 0.0
    %v1084 = vadd.f32 %v1082, %v1083
    %v1085 = vsel %vm73, %v1033, 0.0
    %v1086 = vadd.f32 %v1084, %v1085
    %v1087 = vsel %vm73, %v1034, 0.0
    %v1088 = vadd.f32 %v1086, %v1087
    %v1089 = vrot.slane %v1088, 4
    %v1090 = vadd.f32 %v1088, %v1089
    %v1091 = vrot.slane %v1090, 2
    %v1092 = vadd.f32 %v1090, %v1091
    %v1093 = vrot.slane %v1092, 1
    %v1094 = vadd.f32 %v1092, %v1093
    %v1095 = vsel %vm73, %v1035, 0.0
    %v1096 = vsel %vm73, %v1036, 0.0
    %v1097 = vadd.f32 %v1095, %v1096
    %v1098 = vsel %vm73, %v1037, 0.0
    %v1099 = vadd.f32 %v1097, %v1098
    %v1100 = vsel %vm73, %v1038, 0.0
    %v1101 = vadd.f32 %v1099, %v1100
    %v1102 = vsel %vm73, %v1039, 0.0
    %v1103 = vadd.f32 %v1101, %v1102
    %v1104 = vrot.slane %v1103, 4
    %v1105 = vadd.f32 %v1103, %v1104
    %v1106 = vrot.slane %v1105, 2
    %v1107 = vadd.f32 %v1105, %v1106
    %v1108 = vrot.slane %v1107, 1
    %v1109 = vadd.f32 %v1107, %v1108
    %v1110 = vsel %vm73, %v1040, 0.0
    %v1111 = vsel %vm73, %v1041, 0.0
    %v1112 = vadd.f32 %v1110, %v1111
    %v1113 = vsel %vm73, %v1042, 0.0
    %v1114 = vadd.f32 %v1112, %v1113
    %v1115 = vsel %vm73, %v1043, 0.0
    %v1116 = vadd.f32 %v1114, %v1115
    %v1117 = vsel %vm73, %v1044, 0.0
    %v1118 = vadd.f32 %v1116, %v1117
    %v1119 = vrot.slane %v1118, 4
    %v1120 = vadd.f32 %v1118, %v1119
    %v1121 = vrot.slane %v1120, 2
    %v1122 = vadd.f32 %v1120, %v1121
    %v1123 = vrot.slane %v1122, 1
    %v1124 = vadd.f32 %v1122, %v1123
    %v1125 = vsel %vm73, %v1045, 0.0
    %v1126 = vsel %vm73, %v1046, 0.0
    %v1127 = vadd.f32 %v1125, %v1126
    %v1128 = vsel %vm73, %v1047, 0.0
    %v1129 = vadd.f32 %v1127, %v1128
    %v1130 = vsel %vm73, %v1048, 0.0
    %v1131 = vadd.f32 %v1129, %v1130
    %v1132 = vsel %vm73, %v1049, 0.0
    %v1133 = vadd.f32 %v1131, %v1132
    %v1134 = vrot.slane %v1133, 4
    %v1135 = vadd.f32 %v1133, %v1134
    %v1136 = vrot.slane %v1135, 2
    %v1137 = vadd.f32 %v1135, %v1136
    %v1138 = vrot.slane %v1137, 1
    %v1139 = vadd.f32 %v1137, %v1138
    %v1140 = vsel %vm73, %v1050, 0.0
    %v1141 = vsel %vm73, %v1051, 0.0
    %v1142 = vadd.f32 %v1140, %v1141
    %v1143 = vsel %vm73, %v1052, 0.0
    %v1144 = vadd.f32 %v1142, %v1143
    %v1145 = vsel %vm73, %v1053, 0.0
    %v1146 = vadd.f32 %v1144, %v1145
    %v1147 = vsel %vm73, %v1054, 0.0
    %v1148 = vadd.f32 %v1146, %v1147
    %v1149 = vrot.slane %v1148, 4
    %v1150 = vadd.f32 %v1148, %v1149
    %v1151 = vrot.slane %v1150, 2
    %v1152 = vadd.f32 %v1150, %v1151
    %v1153 = vrot.slane %v1152, 1
    %v1154 = vadd.f32 %v1152, %v1153
    %v1155 = vsel %vm73, %v1055, 0.0
    %v1156 = vsel %vm73, %v1056, 0.0
    %v1157 = vadd.f32 %v1155, %v1156
    %v1158 = vsel %vm73, %v1057, 0.0
    %v1159 = vadd.f32 %v1157, %v1158
    %v1160 = vsel %vm73, %v1058, 0.0
    %v1161 = vadd.f32 %v1159, %v1160
    %v1162 = vsel %vm73, %v1059, 0.0
    %v1163 = vadd.f32 %v1161, %v1162
    %v1164 = vrot.slane %v1163, 4
    %v1165 = vadd.f32 %v1163, %v1164
    %v1166 = vrot.slane %v1165, 2
    %v1167 = vadd.f32 %v1165, %v1166
    %v1168 = vrot.slane %v1167, 1
    %v1169 = vadd.f32 %v1167, %v1168
    %v1170 = vsel %vm73, %v1060, 0.0
    %v1171 = vsel %vm73, %v1061, 0.0
    %v1172 = vadd.f32 %v1170, %v1171
    %v1173 = vsel %vm73, %v1062, 0.0
    %v1174 = vadd.f32 %v1172, %v1173
    %v1175 = vsel %vm73, %v1063, 0.0
    %v1176 = vadd.f32 %v1174, %v1175
    %v1177 = vsel %vm73, %v1064, 0.0
    %v1178 = vadd.f32 %v1176, %v1177
    %v1179 = vrot.slane %v1178, 4
    %v1180 = vadd.f32 %v1178, %v1179
    %v1181 = vrot.slane %v1180, 2
    %v1182 = vadd.f32 %v1180, %v1181
    %v1183 = vrot.slane %v1182, 1
    %v1184 = vadd.f32 %v1182, %v1183
    %v1193 = vsel %vm749, %v1094, %v1079
    %v1194 = vsel %vm751, %v1109, %v1193
    %v1195 = vsel %vm753, %v1124, %v1194
    %v1196 = vsel %vm755, %v1139, %v1195
    %v1197 = vsel %vm757, %v1154, %v1196
    %v1198 = vsel %vm759, %v1169, %v1197
    %v1199 = vsel %vm761, %v1184, %v1198
    %1201 = vst.msk [vmem:[#allocation2] sm:$0xff] %vm73, %v1199
    // Predicated region
    $region26: #{tpu_custom_call.1} parent=1 // pred_check
      _
    $region27: #{tpu_custom_call.1} parent=1 // pred_check_branch
      %1203 = sbr.rel (0) target = $region29
    $region28: #{tpu_custom_call.1} parent=1 // pred_region
      %1205 = vsyncadd [#allocation3], 0
      %s1207 = sshll.u32 [#allocation2], 4
      %s1208 = int_to_ptr.vmem [resolvable:$true] %s1207
      %s1209 = sshll.u32 %s6, 4
      %s1210 = int_to_ptr.hbm [resolvable:$true] %s1209
      %1212 = dma.vmem_to_hbm [thread:$0]  %s1208, 128, %s1210, [#allocation3]
    $region29: #{tpu_custom_call.1} parent=1 // pred_fallthru
      _
    // Predicated region
    $region30: #{tpu_custom_call.1} parent=1 // pred_check
      _
    $region31: #{tpu_custom_call.1} parent=1 // pred_check_branch
      %1214 = sbr.rel (0) target = $region33
    $region32: #{tpu_custom_call.1} parent=1 // pred_region
      %1216 = dma.done [#allocation3], 128
    $region33: #{tpu_custom_call.1} parent=1 // pred_fallthru
      _
    %1217 = vsyncpa [#allocation3], 1

</llo_original>
